<compile_context>
chip_gen: v5e
topology: v5e:2x2
jax: 0.10.0
libtpu: 0.0.40
codegen_flags: <defaults>
</compile_context>

<pallas_src>
import functools

import jax
import jax.numpy as jnp
import numpy as np
from jax.experimental import pallas as pl
from jax.experimental.pallas import tpu as pltpu


def _round_up(x, m):
    return ((x + m - 1) // m) * m


def _default_lane_chunk():
    """MXU-width-gated lane chunk: 128 on v2-v5, 256 on v6e/v7x."""
    try:
        kind = jax.devices()[0].device_kind.lower()
    except Exception:
        kind = ""
    if any(t in kind for t in ("v2", "v3", "v4", "v5")):
        return 128
    return 256


def _make_chunks(hw, lane_chunk):
    """Split [0, hw) into lane chunks; merge a small ragged tail into the
    previous chunk so no chunk pays a full weight-load for a few lanes."""
    lane_chunk = max(1, min(int(lane_chunk), hw))
    chunks = [(s, min(s + lane_chunk, hw)) for s in range(0, hw, lane_chunk)]
    if len(chunks) >= 2 and (chunks[-1][1] - chunks[-1][0]) < lane_chunk // 2:
        prev_start = chunks[-2][0]
        chunks = chunks[:-2] + [(prev_start, hw)]
    return tuple(chunks)


def _vmem_limit_bytes(n, cg, hw, scratch_len, max_chunk):
    in_block = n * cg * hw * 4
    out_block = n * cg * hw * 4
    w_block = cg * 9 * cg * 2
    small = 2 * hw * 2 + 2 * cg * 128 * 4          # masks + gamma/beta (padded)
    scratch = cg * scratch_len * 2 + 9 * cg * max_chunk * 2
    est = 2 * (in_block + out_block + w_block + small) + scratch   # 2x: pipeline buffers
    # ~2x headroom, capped below the v7x per-core physical VMEM (64 MiB).
    return int(min(max(2 * est, 32 * 1024 * 1024), 60 * 1024 * 1024))


def _relu_gconv_bn_relu_kernel(x_ref, w_ref, gamma_ref, beta_ref, mask_ref,
                               o_ref, s_ref, taps_ref, *,
                               eps, n, h, w, cg, d_off, chunks):
    # x_ref:     (N, 1, Cg, H*W)  f32   this group's slice of the NCHW tensor
    # w_ref:     (Cg, 9*Cg)       bf16  tap-concatenated weights (t = kh*3+kw)
    # gamma_ref: (Cg, 1) f32, beta_ref: (Cg, 1) f32
    # mask_ref:  (2, H*W)         bf16  {0,1}: [0]=left-column, [1]=right-column
    # o_ref:     (N, 1, Cg, H*W)  f32
    # s_ref:     (Cg, L)          bf16  flat padded relu(x) row (scratch)
    # taps_ref:  (9*Cg, max_chunk) bf16 stacked tap windows (scratch)
    hw = h * w
    scratch_len = s_ref.shape[1]

    # Zero the scratch margins once per grid step: row-boundary taps then read
    # real zeros (no mask needed, no uninitialized-VMEM reads).
    s_ref[:, :d_off] = jnp.zeros((cg, d_off), jnp.bfloat16)
    s_ref[:, d_off + hw:] = jnp.zeros((cg, scratch_len - d_off - hw),
                                      jnp.bfloat16)

    zeros = jnp.zeros((cg, 1), jnp.float32)

    def conv_batch(b, ch_sum):
        # Fused input ReLU, cast to bf16 for the MXU, stash in the flat scratch.
        xi = jnp.maximum(x_ref[b, 0], 0.0).astype(jnp.bfloat16)
        s_ref[:, d_off:d_off + hw] = xi

        for (c0, c1) in chunks:
            lc = c1 - c0
            # Column-border validity masks for this chunk (bf16 {0,1}).
            mask_l = mask_ref[0:1, c0:c1]
            mask_r = mask_ref[1:2, c0:c1]
            # Stack the 9 shifted (masked) tap windows along sublanes so the
            # whole 3x3 conv for this chunk is a single K = 9*Cg matmul.
            for kh in range(3):
                for kw in range(3):
                    t = kh * 3 + kw
                    start = d_off + (kh - 1) * w + (kw - 1) + c0
                    win = s_ref[:, start:start + lc]
                    if kw == 0:
                        win = win * mask_l
                    elif kw == 2:
                        win = win * mask_r
                    taps_ref[t * cg:(t + 1) * cg, :lc] = win
            acc = jnp.dot(w_ref[...], taps_ref[:, :lc],
                          preferred_element_type=jnp.float32)
            # Stage the pre-BN conv output directly in the output block.
            o_ref[b, 0, :, c0:c1] = acc
            ch_sum = ch_sum + jnp.sum(acc, axis=1, keepdims=True)
        return ch_sum

    if n == 1:
        ch_sum = conv_batch(0, zeros)
    else:
        ch_sum = jax.lax.fori_loop(0, n, conv_batch, zeros)

    inv_cnt = 1.0 / float(n * hw)
    mean = ch_sum * inv_cnt

    # Centered (two-pass) variance over the staged conv output: numerically
    # safer than E[x^2] - E[x]^2 for post-ReLU activations with large means.
    def var_batch(b, ch_var):
        d = o_ref[b, 0] - mean
        return ch_var + jnp.sum(d * d, axis=1, keepdims=True)

    if n == 1:
        ch_var = var_batch(0, zeros)
    else:
        ch_var = jax.lax.fori_loop(0, n, var_batch, zeros)

    var = ch_var * inv_cnt                        # biased variance (BN training)
    scale = gamma_ref[...] * jax.lax.rsqrt(var + eps)
    shift = beta_ref[...] - mean * scale

    def fin_batch(b, carry):
        # In-place BN + output ReLU on the staged conv results.
        o_ref[b, 0] = jnp.maximum(o_ref[b, 0] * scale + shift, 0.0)
        return carry

    if n == 1:
        fin_batch(0, 0)
    else:
        jax.lax.fori_loop(0, n, fin_batch, 0)


def relu_gconv_bn_relu(x, w, gamma, beta, *, groups, eps=1e-5, lane_chunk=None):
    """x: (N, C, H, W) f32, w: (C, C//groups, 3, 3), gamma/beta: (C,)."""
    N, C, H, W = x.shape
    G = groups
    assert C % G == 0
    Cg = C // G
    HW = H * W
    assert w.shape == (C, Cg, 3, 3)

    # Free, metadata-only reshape: data stays in NCHW order in HBM.
    xr = jnp.reshape(x, (N, G, Cg, HW))

    # Weights repacked for the tap-concatenated matmul:
    #   out[g] = Wcat[g] @ stack_t(win_t),  Wcat[g]: (Cg_out, 9*Cg_in),
    #   column block t = kh*3 + kw holds that tap's (Cg_out, Cg_in) matrix.
    wg = (w.reshape(G, Cg, Cg, 3, 3)
           .transpose(0, 1, 3, 4, 2)              # (G, c_out, kh, kw, c_in)
           .reshape(G, Cg, 9 * Cg)
           .astype(jnp.bfloat16))

    gg = gamma.reshape(G, Cg, 1).astype(jnp.float32)
    bg = beta.reshape(G, Cg, 1).astype(jnp.float32)

    # Column-border masks as bf16 {0,1}.  Row-border taps need no mask: they
    # read the zeroed scratch margins.
    col = np.arange(HW) % W
    mask_np = np.stack([(col != 0), (col != W - 1)]).astype(np.float32)
    mask = jnp.asarray(mask_np, dtype=jnp.bfloat16)

    # Flat scratch layout: image data starts at a 128-aligned lane offset; tap
    # windows reach at most W+1 lanes either side (covered by zeroed margins).
    d_off = _round_up(W + 1, 128)
    scratch_len = _round_up(d_off + HW + W + 1, 128)

    # Lane (spatial) chunking, gated on MXU width (128 on v4/v5, 256 on
    # v6e/v7x); small ragged tails are merged into the previous chunk.
    if lane_chunk is None:
        lane_chunk = _default_lane_chunk()
    chunks = _make_chunks(HW, lane_chunk)
    max_chunk = max(c1 - c0 for c0, c1 in chunks)

    kernel = functools.partial(
        _relu_gconv_bn_relu_kernel, eps=eps, n=N, h=H, w=W, cg=Cg,
        d_off=d_off, chunks=chunks)

    out = pl.pallas_call(
        kernel,
        out_shape=jax.ShapeDtypeStruct((N, G, Cg, HW), jnp.float32),
        grid=(G,),
        in_specs=[
            pl.BlockSpec((N, 1, Cg, HW), lambda g: (0, g, 0, 0)),
            pl.BlockSpec((None, Cg, 9 * Cg), lambda g: (g, 0, 0)),
            pl.BlockSpec((None, Cg, 1), lambda g: (g, 0, 0)),
            pl.BlockSpec((None, Cg, 1), lambda g: (g, 0, 0)),
            pl.BlockSpec((2, HW), lambda g: (0, 0)),
        ],
        out_specs=pl.BlockSpec((N, 1, Cg, HW), lambda g: (0, g, 0, 0)),
        scratch_shapes=[
            pltpu.VMEM((Cg, scratch_len), jnp.bfloat16),
            pltpu.VMEM((9 * Cg, max_chunk), jnp.bfloat16),
        ],
        # grid=(G,) "parallel": G=4 splits 2/2 across v7x's two TensorCores.
        # TODO(synk): if G ever drops below the core count, add a second
        # parallel axis (e.g. lane-chunk halves with partial BN stats).
        compiler_params=pltpu.CompilerParams(
            dimension_semantics=("parallel",),
            vmem_limit_bytes=_vmem_limit_bytes(N, Cg, HW, scratch_len,
                                               max_chunk)),
    )(xr, wg, gg, bg, mask)

    # Free reshape back to NCHW.
    return out.reshape(N, C, H, W)


def _reference(x, w, gamma, beta, *, groups, eps=1e-5):
    x = jnp.maximum(x, 0.0)
    y = jax.lax.conv_general_dilated(
        x, w, window_strides=(1, 1), padding=((1, 1), (1, 1)),
        dimension_numbers=("NCHW", "OIHW", "NCHW"),
        feature_group_count=groups)
    mean = jnp.mean(y, axis=(0, 2, 3), keepdims=True)
    var = jnp.mean((y - mean) ** 2, axis=(0, 2, 3), keepdims=True)
    y = (y - mean) * jax.lax.rsqrt(var + eps) * gamma.reshape(1, -1, 1, 1) \
        + beta.reshape(1, -1, 1, 1)
    return jnp.maximum(y, 0.0)


def _run_case(key, N, C, H, W, G, lane_chunk=None):
    kx, kw, kg, kb = jax.random.split(key, 4)
    Cg = C // G
    x = jax.random.normal(kx, (N, C, H, W), dtype=jnp.float32)
    conv_w = 0.1 * jax.random.normal(kw, (C, Cg, 3, 3), dtype=jnp.float32)
    gamma = 1.0 + 0.1 * jax.random.normal(kg, (C,), dtype=jnp.float32)
    beta = 0.1 * jax.random.normal(kb, (C,), dtype=jnp.float32)

    y = relu_gconv_bn_relu(x, conv_w, gamma, beta, groups=G,
                           lane_chunk=lane_chunk)
    y = jax.block_until_ready(y)
    y_ref = jax.block_until_ready(
        _reference(x, conv_w, gamma, beta, groups=G))
    # bf16 MXU operands -> loosened tolerance vs the f32 reference.
    np.testing.assert_allclose(np.asarray(y), np.asarray(y_ref),
                               rtol=2e-2, atol=2e-2)


if __name__ == "__main__":
    # Small shapes consistent with the module (original: 1x1056x28x28, groups=4).
    key = jax.random.PRNGKey(0)
    k0, k1 = jax.random.split(key)

    # Config A: batch 1, H*W a multiple of 128 (lane-dense), default chunking.
    _run_case(k0, N=1, C=32, H=16, W=16, G=4)

    # Config B: batch > 1 (fori_loop batch path), non-power-of-two spatial,
    # forced small lane chunks to exercise multi-chunk + ragged-tail merging.
    _run_case(k1, N=2, C=32, H=14, W=14, G=4, lane_chunk=64)

    print("KERNEL_OK")
</pallas_src>

<mosaic_0001>
module attributes {stable_mosaic.version = 11 : i64} {
  func.func @_relu_gconv_bn_relu_kernel(%arg0: i32, %arg1: memref<1x1x8x256xf32, #tpu.memory_space<vmem>>, %arg2: memref<1x8x72xbf16, #tpu.memory_space<vmem>>, %arg3: memref<1x8x1xf32, #tpu.memory_space<vmem>>, %arg4: memref<1x8x1xf32, #tpu.memory_space<vmem>>, %arg5: memref<2x256xbf16, #tpu.memory_space<vmem>>, %arg6: memref<1x1x8x256xf32, #tpu.memory_space<vmem>>, %arg7: memref<8x512xbf16, #tpu.memory_space<vmem>>, %arg8: memref<72x256xbf16, #tpu.memory_space<vmem>>) attributes {dimension_semantics = [#tpu.dimension_semantics<parallel>], iteration_bounds = array<i64: 4>, scalar_prefetch = 0 : i64, scratch_operands = 2 : i64, tpu.core_type = #tpu.core_type<tc>, window_params = [{transform_indices = @transform_0, window_bounds = array<i64: 1, 1, 8, 256>}, {transform_indices = @transform_1, window_bounds = array<i64: 1, 8, 72>}, {transform_indices = @transform_2, window_bounds = array<i64: 1, 8, 1>}, {transform_indices = @transform_3, window_bounds = array<i64: 1, 8, 1>}, {pipeline_mode = #tpu.pipeline_mode<synchronous>, transform_indices = @transform_4, window_bounds = array<i64: 2, 256>}, {transform_indices = @transform_5, window_bounds = array<i64: 1, 1, 8, 256>}]} {
    %cst = arith.constant 0.000000e+00 : bf16
    %0 = vector.broadcast %cst : bf16 to vector<8x128xbf16>
    %c0 = arith.constant 0 : index
    %c0_0 = arith.constant 0 : index
    %1 = vector.load %arg7[%c0, %c0_0] : memref<8x512xbf16, #tpu.memory_space<vmem>>, vector<8x128xbf16>
    tpu.vector_store %arg7[%c0, %c0_0], %0 {strides = array<i32>} : memref<8x512xbf16, #tpu.memory_space<vmem>>, vector<8x128xbf16>,
    %cst_1 = arith.constant 0.000000e+00 : bf16
    %2 = vector.broadcast %cst_1 : bf16 to vector<8x128xbf16>
    %c0_2 = arith.constant 0 : index
    %c384 = arith.constant 384 : index
    %3 = vector.load %arg7[%c0_2, %c384] : memref<8x512xbf16, #tpu.memory_space<vmem>>, vector<8x128xbf16>
    tpu.vector_store %arg7[%c0_2, %c384], %2 {strides = array<i32>} : memref<8x512xbf16, #tpu.memory_space<vmem>>, vector<8x128xbf16>,
    %cst_3 = arith.constant 0.000000e+00 : f32
    %4 = vector.broadcast %cst_3 : f32 to vector<8x1xf32>
    %c0_4 = arith.constant 0 : index
    %c0_5 = arith.constant 0 : index
    %c0_6 = arith.constant 0 : index
    %c0_7 = arith.constant 0 : index
    %5 = vector.load %arg1[%c0_4, %c0_5, %c0_6, %c0_7] : memref<1x1x8x256xf32, #tpu.memory_space<vmem>>, vector<1x1x8x256xf32>
    %6 = vector.shape_cast %5 : vector<1x1x8x256xf32> to vector<8x256xf32>
    %cst_8 = arith.constant 0.000000e+00 : f32
    %7 = vector.broadcast %cst_8 : f32 to vector<8x256xf32>
    %8 = arith.maximumf %6, %7 : vector<8x256xf32>
    %9 = arith.truncf %8 : vector<8x256xf32> to vector<8x256xbf16>
    %c0_9 = arith.constant 0 : index
    %c128 = arith.constant 128 : index
    %10 = vector.load %arg7[%c0_9, %c128] : memref<8x512xbf16, #tpu.memory_space<vmem>>, vector<8x256xbf16>
    tpu.vector_store %arg7[%c0_9, %c128], %9 {strides = array<i32>} : memref<8x512xbf16, #tpu.memory_space<vmem>>, vector<8x256xbf16>,
    %c0_10 = arith.constant 0 : index
    %c0_11 = arith.constant 0 : index
    %11 = vector.load %arg5[%c0_10, %c0_11] : memref<2x256xbf16, #tpu.memory_space<vmem>>, vector<1x256xbf16>
    %c1 = arith.constant 1 : index
    %c0_12 = arith.constant 0 : index
    %12 = vector.load %arg5[%c1, %c0_12] : memref<2x256xbf16, #tpu.memory_space<vmem>>, vector<1x256xbf16>
    %c0_13 = arith.constant 0 : index
    %c111 = arith.constant 111 : index
    %13 = vector.load %arg7[%c0_13, %c111] : memref<8x512xbf16, #tpu.memory_space<vmem>>, vector<8x256xbf16>
    %14 = vector.broadcast %11 : vector<1x256xbf16> to vector<8x256xbf16>
    %15 = arith.mulf %13, %14 : vector<8x256xbf16>
    %c0_14 = arith.constant 0 : index
    %c0_15 = arith.constant 0 : index
    %16 = vector.load %arg8[%c0_14, %c0_15] : memref<72x256xbf16, #tpu.memory_space<vmem>>, vector<8x256xbf16>
    tpu.vector_store %arg8[%c0_14, %c0_15], %15 {strides = array<i32>} : memref<72x256xbf16, #tpu.memory_space<vmem>>, vector<8x256xbf16>,
    %c0_16 = arith.constant 0 : index
    %c112 = arith.constant 112 : index
    %17 = vector.load %arg7[%c0_16, %c112] : memref<8x512xbf16, #tpu.memory_space<vmem>>, vector<8x256xbf16>
    %c8 = arith.constant 8 : index
    %c0_17 = arith.constant 0 : index
    %18 = vector.load %arg8[%c8, %c0_17] : memref<72x256xbf16, #tpu.memory_space<vmem>>, vector<8x256xbf16>
    tpu.vector_store %arg8[%c8, %c0_17], %17 {strides = array<i32>} : memref<72x256xbf16, #tpu.memory_space<vmem>>, vector<8x256xbf16>,
    %c0_18 = arith.constant 0 : index
    %c113 = arith.constant 113 : index
    %19 = vector.load %arg7[%c0_18, %c113] : memref<8x512xbf16, #tpu.memory_space<vmem>>, vector<8x256xbf16>
    %20 = vector.broadcast %12 : vector<1x256xbf16> to vector<8x256xbf16>
    %21 = arith.mulf %19, %20 : vector<8x256xbf16>
    %c16 = arith.constant 16 : index
    %c0_19 = arith.constant 0 : index
    %22 = vector.load %arg8[%c16, %c0_19] : memref<72x256xbf16, #tpu.memory_space<vmem>>, vector<8x256xbf16>
    tpu.vector_store %arg8[%c16, %c0_19], %21 {strides = array<i32>} : memref<72x256xbf16, #tpu.memory_space<vmem>>, vector<8x256xbf16>,
    %c0_20 = arith.constant 0 : index
    %c127 = arith.constant 127 : index
    %23 = vector.load %arg7[%c0_20, %c127] : memref<8x512xbf16, #tpu.memory_space<vmem>>, vector<8x256xbf16>
    %24 = vector.broadcast %11 : vector<1x256xbf16> to vector<8x256xbf16>
    %25 = arith.mulf %23, %24 : vector<8x256xbf16>
    %c24 = arith.constant 24 : index
    %c0_21 = arith.constant 0 : index
    %26 = vector.load %arg8[%c24, %c0_21] : memref<72x256xbf16, #tpu.memory_space<vmem>>, vector<8x256xbf16>
    tpu.vector_store %arg8[%c24, %c0_21], %25 {strides = array<i32>} : memref<72x256xbf16, #tpu.memory_space<vmem>>, vector<8x256xbf16>,
    %c0_22 = arith.constant 0 : index
    %c128_23 = arith.constant 128 : index
    %27 = vector.load %arg7[%c0_22, %c128_23] : memref<8x512xbf16, #tpu.memory_space<vmem>>, vector<8x256xbf16>
    %c32 = arith.constant 32 : index
    %c0_24 = arith.constant 0 : index
    %28 = vector.load %arg8[%c32, %c0_24] : memref<72x256xbf16, #tpu.memory_space<vmem>>, vector<8x256xbf16>
    tpu.vector_store %arg8[%c32, %c0_24], %27 {strides = array<i32>} : memref<72x256xbf16, #tpu.memory_space<vmem>>, vector<8x256xbf16>,
    %c0_25 = arith.constant 0 : index
    %c129 = arith.constant 129 : index
    %29 = vector.load %arg7[%c0_25, %c129] : memref<8x512xbf16, #tpu.memory_space<vmem>>, vector<8x256xbf16>
    %30 = vector.broadcast %12 : vector<1x256xbf16> to vector<8x256xbf16>
    %31 = arith.mulf %29, %30 : vector<8x256xbf16>
    %c40 = arith.constant 40 : index
    %c0_26 = arith.constant 0 : index
    %32 = vector.load %arg8[%c40, %c0_26] : memref<72x256xbf16, #tpu.memory_space<vmem>>, vector<8x256xbf16>
    tpu.vector_store %arg8[%c40, %c0_26], %31 {strides = array<i32>} : memref<72x256xbf16, #tpu.memory_space<vmem>>, vector<8x256xbf16>,
    %c0_27 = arith.constant 0 : index
    %c143 = arith.constant 143 : index
    %33 = vector.load %arg7[%c0_27, %c143] : memref<8x512xbf16, #tpu.memory_space<vmem>>, vector<8x256xbf16>
    %34 = vector.broadcast %11 : vector<1x256xbf16> to vector<8x256xbf16>
    %35 = arith.mulf %33, %34 : vector<8x256xbf16>
    %c48 = arith.constant 48 : index
    %c0_28 = arith.constant 0 : index
    %36 = vector.load %arg8[%c48, %c0_28] : memref<72x256xbf16, #tpu.memory_space<vmem>>, vector<8x256xbf16>
    tpu.vector_store %arg8[%c48, %c0_28], %35 {strides = array<i32>} : memref<72x256xbf16, #tpu.memory_space<vmem>>, vector<8x256xbf16>,
    %c0_29 = arith.constant 0 : index
    %c144 = arith.constant 144 : index
    %37 = vector.load %arg7[%c0_29, %c144] : memref<8x512xbf16, #tpu.memory_space<vmem>>, vector<8x256xbf16>
    %c56 = arith.constant 56 : index
    %c0_30 = arith.constant 0 : index
    %38 = vector.load %arg8[%c56, %c0_30] : memref<72x256xbf16, #tpu.memory_space<vmem>>, vector<8x256xbf16>
    tpu.vector_store %arg8[%c56, %c0_30], %37 {strides = array<i32>} : memref<72x256xbf16, #tpu.memory_space<vmem>>, vector<8x256xbf16>,
    %c0_31 = arith.constant 0 : index
    %c145 = arith.constant 145 : index
    %39 = vector.load %arg7[%c0_31, %c145] : memref<8x512xbf16, #tpu.memory_space<vmem>>, vector<8x256xbf16>
    %40 = vector.broadcast %12 : vector<1x256xbf16> to vector<8x256xbf16>
    %41 = arith.mulf %39, %40 : vector<8x256xbf16>
    %c64 = arith.constant 64 : index
    %c0_32 = arith.constant 0 : index
    %42 = vector.load %arg8[%c64, %c0_32] : memref<72x256xbf16, #tpu.memory_space<vmem>>, vector<8x256xbf16>
    tpu.vector_store %arg8[%c64, %c0_32], %41 {strides = array<i32>} : memref<72x256xbf16, #tpu.memory_space<vmem>>, vector<8x256xbf16>,
    %c0_33 = arith.constant 0 : index
    %c0_34 = arith.constant 0 : index
    %c0_35 = arith.constant 0 : index
    %43 = vector.load %arg2[%c0_33, %c0_34, %c0_35] : memref<1x8x72xbf16, #tpu.memory_space<vmem>>, vector<1x8x72xbf16>
    %44 = vector.shape_cast %43 : vector<1x8x72xbf16> to vector<8x72xbf16>
    %c0_36 = arith.constant 0 : index
    %c0_37 = arith.constant 0 : index
    %45 = vector.load %arg8[%c0_36, %c0_37] : memref<72x256xbf16, #tpu.memory_space<vmem>>, vector<72x256xbf16>
    %cst_38 = arith.constant dense<0.000000e+00> : vector<8x256xf32>
    %46 = tpu.matmul %44, %45, %cst_38 {dimension_numbers = #tpu.dot_dimension_numbers<[1], [0], [0], [1], [0, 0, 1, 1], [], []>} : vector<8x72xbf16>, vector<72x256xbf16>, vector<8x256xf32> -> vector<8x256xf32>
    %c0_39 = arith.constant 0 : index
    %c0_40 = arith.constant 0 : index
    %c0_41 = arith.constant 0 : index
    %c0_42 = arith.constant 0 : index
    %47 = vector.load %arg6[%c0_39, %c0_40, %c0_41, %c0_42] : memref<1x1x8x256xf32, #tpu.memory_space<vmem>>, vector<1x1x8x256xf32>
    %48 = vector.shape_cast %47 : vector<1x1x8x256xf32> to vector<8x256xf32>
    %49 = vector.shape_cast %46 : vector<8x256xf32> to vector<1x1x8x256xf32>
    tpu.vector_store %arg6[%c0_39, %c0_40, %c0_41, %c0_42], %49 {strides = array<i32>} : memref<1x1x8x256xf32, #tpu.memory_space<vmem>>, vector<1x1x8x256xf32>,
    %cst_43 = arith.constant dense<0.000000e+00> : vector<8xf32>
    %50 = vector.multi_reduction <add>, %46, %cst_43 [1] : vector<8x256xf32> to vector<8xf32>
    %51 = vector.shape_cast %50 : vector<8xf32> to vector<8x1xf32>
    %52 = arith.addf %4, %51 : vector<8x1xf32>
    %cst_44 = arith.constant 3.906250e-03 : f32
    %53 = vector.broadcast %cst_44 : f32 to vector<8x1xf32>
    %54 = arith.mulf %52, %53 : vector<8x1xf32>
    %c0_45 = arith.constant 0 : index
    %c0_46 = arith.constant 0 : index
    %c0_47 = arith.constant 0 : index
    %c0_48 = arith.constant 0 : index
    %55 = vector.load %arg6[%c0_45, %c0_46, %c0_47, %c0_48] : memref<1x1x8x256xf32, #tpu.memory_space<vmem>>, vector<1x1x8x256xf32>
    %56 = vector.shape_cast %55 : vector<1x1x8x256xf32> to vector<8x256xf32>
    %57 = vector.broadcast %54 : vector<8x1xf32> to vector<8x256xf32>
    %58 = arith.subf %56, %57 : vector<8x256xf32>
    %59 = arith.mulf %58, %58 : vector<8x256xf32>
    %cst_49 = arith.constant dense<0.000000e+00> : vector<8xf32>
    %60 = vector.multi_reduction <add>, %59, %cst_49 [1] : vector<8x256xf32> to vector<8xf32>
    %61 = vector.shape_cast %60 : vector<8xf32> to vector<8x1xf32>
    %62 = arith.addf %4, %61 : vector<8x1xf32>
    %cst_50 = arith.constant 3.906250e-03 : f32
    %63 = vector.broadcast %cst_50 : f32 to vector<8x1xf32>
    %64 = arith.mulf %62, %63 : vector<8x1xf32>
    %c0_51 = arith.constant 0 : index
    %c0_52 = arith.constant 0 : index
    %c0_53 = arith.constant 0 : index
    %65 = vector.load %arg3[%c0_51, %c0_52, %c0_53] : memref<1x8x1xf32, #tpu.memory_space<vmem>>, vector<1x8x1xf32>
    %66 = vector.shape_cast %65 : vector<1x8x1xf32> to vector<8x1xf32>
    %cst_54 = arith.constant 9.99999974E-6 : f32
    %67 = vector.broadcast %cst_54 : f32 to vector<8x1xf32>
    %68 = arith.addf %64, %67 : vector<8x1xf32>
    %69 = math.rsqrt %68 : vector<8x1xf32>
    %70 = arith.mulf %66, %69 : vector<8x1xf32>
    %c0_55 = arith.constant 0 : index
    %c0_56 = arith.constant 0 : index
    %c0_57 = arith.constant 0 : index
    %71 = vector.load %arg4[%c0_55, %c0_56, %c0_57] : memref<1x8x1xf32, #tpu.memory_space<vmem>>, vector<1x8x1xf32>
    %72 = vector.shape_cast %71 : vector<1x8x1xf32> to vector<8x1xf32>
    %73 = arith.mulf %54, %70 : vector<8x1xf32>
    %74 = arith.subf %72, %73 : vector<8x1xf32>
    %c0_58 = arith.constant 0 : index
    %c0_59 = arith.constant 0 : index
    %c0_60 = arith.constant 0 : index
    %c0_61 = arith.constant 0 : index
    %75 = vector.load %arg6[%c0_58, %c0_59, %c0_60, %c0_61] : memref<1x1x8x256xf32, #tpu.memory_space<vmem>>, vector<1x1x8x256xf32>
    %76 = vector.shape_cast %75 : vector<1x1x8x256xf32> to vector<8x256xf32>
    %77 = vector.broadcast %70 : vector<8x1xf32> to vector<8x256xf32>
    %78 = arith.mulf %76, %77 : vector<8x256xf32>
    %79 = vector.broadcast %74 : vector<8x1xf32> to vector<8x256xf32>
    %80 = arith.addf %78, %79 : vector<8x256xf32>
    %cst_62 = arith.constant 0.000000e+00 : f32
    %81 = vector.broadcast %cst_62 : f32 to vector<8x256xf32>
    %82 = arith.maximumf %80, %81 : vector<8x256xf32>
    %c0_63 = arith.constant 0 : index
    %c0_64 = arith.constant 0 : index
    %c0_65 = arith.constant 0 : index
    %c0_66 = arith.constant 0 : index
    %83 = vector.load %arg6[%c0_63, %c0_64, %c0_65, %c0_66] : memref<1x1x8x256xf32, #tpu.memory_space<vmem>>, vector<1x1x8x256xf32>
    %84 = vector.shape_cast %83 : vector<1x1x8x256xf32> to vector<8x256xf32>
    %85 = vector.shape_cast %82 : vector<8x256xf32> to vector<1x1x8x256xf32>
    tpu.vector_store %arg6[%c0_63, %c0_64, %c0_65, %c0_66], %85 {strides = array<i32>} : memref<1x1x8x256xf32, #tpu.memory_space<vmem>>, vector<1x1x8x256xf32>,
    return
  }
  func.func @transform_0(%arg0: i32) -> (i32, i32, i32, i32) {
    %c0_i32 = arith.constant 0 : i32
    %c0_i32_0 = arith.constant 0 : i32
    %c0_i32_1 = arith.constant 0 : i32
    %c0_i32_2 = arith.constant 0 : i32
    return %c0_i32, %arg0, %c0_i32_0, %c0_i32_1 : i32, i32, i32, i32
  }
  func.func @transform_1(%arg0: i32) -> (i32, i32, i32) {
    %c0_i32 = arith.constant 0 : i32
    %c0_i32_0 = arith.constant 0 : i32
    %c0_i32_1 = arith.constant 0 : i32
    return %arg0, %c0_i32, %c0_i32_0 : i32, i32, i32
  }
  func.func @transform_2(%arg0: i32) -> (i32, i32, i32) {
    %c0_i32 = arith.constant 0 : i32
    %c0_i32_0 = arith.constant 0 : i32
    %c0_i32_1 = arith.constant 0 : i32
    return %arg0, %c0_i32, %c0_i32_0 : i32, i32, i32
  }
  func.func @transform_3(%arg0: i32) -> (i32, i32, i32) {
    %c0_i32 = arith.constant 0 : i32
    %c0_i32_0 = arith.constant 0 : i32
    %c0_i32_1 = arith.constant 0 : i32
    return %arg0, %c0_i32, %c0_i32_0 : i32, i32, i32
  }
  func.func @transform_4(%arg0: i32) -> (i32, i32) {
    %c0_i32 = arith.constant 0 : i32
    %c0_i32_0 = arith.constant 0 : i32
    %c0_i32_1 = arith.constant 0 : i32
    return %c0_i32, %c0_i32_0 : i32, i32
  }
  func.func @transform_5(%arg0: i32) -> (i32, i32, i32, i32) {
    %c0_i32 = arith.constant 0 : i32
    %c0_i32_0 = arith.constant 0 : i32
    %c0_i32_1 = arith.constant 0 : i32
    %c0_i32_2 = arith.constant 0 : i32
    return %c0_i32, %arg0, %c0_i32_0, %c0_i32_1 : i32, i32, i32, i32
  }
}

</mosaic_0001>

<llo_original>
// kernel: tpu_custom_call.1
$region0: #{tpu_custom_call.1}
  #allocation0 [shape = 'u32[]', space=smem, size = 0x4, offset = 0x4, fixed_abs, tag = 'smem constant byte address 0x4 - core index']
  #allocation1 [shape = 'u32[72,128]{1,0:T(1,128)}', space=vmem, size = 0x9000, scoped, tag = 'internal scratch']
  #allocation2 [shape = 'bf16[8,512]{1,0:T(8,128)(2,1)}', space=vmem, size = 0x2000, scoped, tag = 'scratch operand']
  #allocation3 [shape = 'bf16[72,256]{1,0:T(8,128)(2,1)}', space=vmem, size = 0x9000, scoped, tag = 'scratch operand']
  %s0 = inlined_call_operand.vmem [shape: f32[1,4,8,256], index: 0, kind: input, shape index: {}]
  %s1 = inlined_call_operand.hbm [shape: bf16[4,8,72], index: 1, kind: input, shape index: {}]
  %s2 = inlined_call_operand.vmem [shape: f32[4,8,1], index: 2, kind: input, shape index: {}]
  %s3 = inlined_call_operand.vmem [shape: f32[4,8,1], index: 3, kind: input, shape index: {}]
  %s4 = inlined_call_operand.vmem [shape: bf16[2,256], index: 4, kind: input, shape index: {}]
  %s5 = inlined_call_operand.hbm [shape: f32[1,4,8,256], index: 5, kind: output, shape index: {}]
  %s6 = sld [smem:[#allocation0]]
  $region57: #{tpu_custom_call.1} parent=0
    _
  %s8 = ssub.s32 1, %s6
  %s9 = scalar_select 0, %s8, %s6
  $region1: #{tpu_custom_call.1} parent=0
    #allocation4 [shape = 'u8[4096]{0}', space=vmem, size = 0x1000, scoped, tag = 'input window, operand 1']
    #allocation5 [shape = 's32[2]{0}', space=sflag, size = 0x8, scoped, tag = 'scoped memory for tpu_custom_call.1']
    #allocation6 [shape = 's32[2]{0}', space=sflag, size = 0x8, scoped, tag = 'scoped memory for tpu_custom_call.1']
    #allocation7 [shape = 'u8[16384]{0}', space=vmem, size = 0x4000, scoped, tag = 'output window, operand 0']
    %10 = vsyncpa [#allocation5], 0
    %s11 = scalar_lea.sflag [#allocation5], 1
    %12 = vsyncpa %s11, 0
    %13 = vsyncpa [#allocation6], 0
    %s14 = scalar_lea.sflag [#allocation6], 1
    %15 = vsyncpa %s14, 0
    loop: start=0, step=1, limit=6
    $region2: #{tpu_custom_call.1} parent=1 // loop_pre_header
      _
    $region3: #{tpu_custom_call.1} parent=1 // loop_header
      %s17 = sphi 0, %s21
      %p18 = scmp.ge.s32.totalorder %s17, 6
      %s27 = sphi 0, %s29
      %s30 = sphi 0, %s27
      %s31 = sphi 0, %s30
      %s47 = sphi 0, %s31
      %s53 = sphi 0, %s55
      %s56 = sphi 0, %s53
      %s57 = sphi 0, %s56
      %s73 = sphi 0, %s57
      %s79 = sphi 0, %s81
      %s82 = sphi 0, %s79
      %s83 = sphi 0, %s82
      %s99 = sphi 0, %s83
      %s105 = sphi 0, %s107
      %s108 = sphi 0, %s105
      %s109 = sphi 0, %s108
      %s125 = sphi 0, %s109
      %s129 = sphi 0, %s129
      %s131 = sphi 0, %s129
      %s132 = sphi 0, %s131
      %s146 = sphi 0, %s132
      %s152 = sphi 0, %s154
      %s155 = sphi 0, %s152
      %s156 = sphi 0, %s155
      %s172 = sphi 0, %s156
    $region4: #{tpu_custom_call.1} parent=1 // loop_header_branch
      %20 = sbr.rel (%p18) target = $region8
    $region5: #{tpu_custom_call.1} parent=1 // loop_body
      %s22 = ssub.s32 %s17, 1
      %s23 = ssub.s32 %s17, 2
      %s24 = sadd.s32 %s17, 1
      %s25 = ssub.s32 %s17, %s24
      %p26 = scmp.eq.s32.totalorder %s25, 0
      %s28 = sadd.s32 %s27, 1
      %s29 = scalar_select %p26, %s27, %s28
      %p32 = pneg %p26
      %p33 = scmp.eq.s32.totalorder %s17, 3
      %p34 = por %p32, %p33
      %p35 = scmp.ne.s32.totalorder %s27, %s30
      %p36 = scmp.eq.s32.totalorder %s17, 0
      %p37 = por %p35, %p36
      %p38 = scmp.ne.s32.totalorder %s27, %s30
      %p39 = scmp.eq.s32.totalorder %s22, 3
      %p40 = por %p38, %p39
      %p41 = scmp.ne.s32.totalorder %s30, %s31
      %p42 = scmp.eq.s32.totalorder %s22, 0
      %p43 = por %p41, %p42
      %p44 = scmp.ne.s32.totalorder %s30, %s31
      %p45 = scmp.eq.s32.totalorder %s23, 3
      %p46 = por %p44, %p45
      %p48 = scmp.ne.s32.totalorder %s31, %s47
      %p49 = scmp.eq.s32.totalorder %s23, 0
      %p50 = por %p48, %p49
      %s51 = ssub.s32 %s17, %s24
      %p52 = scmp.eq.s32.totalorder %s51, 0
      %s54 = sadd.s32 %s53, 1
      %s55 = scalar_select %p52, %s53, %s54
      %p58 = pneg %p52
      %p59 = scmp.eq.s32.totalorder %s17, 3
      %p60 = por %p58, %p59
      %p61 = scmp.ne.s32.totalorder %s53, %s56
      %p62 = scmp.eq.s32.totalorder %s17, 0
      %p63 = por %p61, %p62
      %p64 = scmp.ne.s32.totalorder %s53, %s56
      %p65 = scmp.eq.s32.totalorder %s22, 3
      %p66 = por %p64, %p65
      %p67 = scmp.ne.s32.totalorder %s56, %s57
      %p68 = scmp.eq.s32.totalorder %s22, 0
      %p69 = por %p67, %p68
      %p70 = scmp.ne.s32.totalorder %s56, %s57
      %p71 = scmp.eq.s32.totalorder %s23, 3
      %p72 = por %p70, %p71
      %p74 = scmp.ne.s32.totalorder %s57, %s73
      %p75 = scmp.eq.s32.totalorder %s23, 0
      %p76 = por %p74, %p75
      %s77 = ssub.s32 %s17, %s24
      %p78 = scmp.eq.s32.totalorder %s77, 0
      %s80 = sadd.s32 %s79, 1
      %s81 = scalar_select %p78, %s79, %s80
      %p84 = pneg %p78
      %p85 = scmp.eq.s32.totalorder %s17, 3
      %p86 = por %p84, %p85
      %p87 = scmp.ne.s32.totalorder %s79, %s82
      %p88 = scmp.eq.s32.totalorder %s17, 0
      %p89 = por %p87, %p88
      %p90 = scmp.ne.s32.totalorder %s79, %s82
      %p91 = scmp.eq.s32.totalorder %s22, 3
      %p92 = por %p90, %p91
      %p93 = scmp.ne.s32.totalorder %s82, %s83
      %p94 = scmp.eq.s32.totalorder %s22, 0
      %p95 = por %p93, %p94
      %p96 = scmp.ne.s32.totalorder %s82, %s83
      %p97 = scmp.eq.s32.totalorder %s23, 3
      %p98 = por %p96, %p97
      %p100 = scmp.ne.s32.totalorder %s83, %s99
      %p101 = scmp.eq.s32.totalorder %s23, 0
      %p102 = por %p100, %p101
      %s103 = ssub.s32 %s17, %s24
      %p104 = scmp.eq.s32.totalorder %s103, 0
      %s106 = sadd.s32 %s105, 1
      %s107 = scalar_select %p104, %s105, %s106
      %p110 = pneg %p104
      %p111 = scmp.eq.s32.totalorder %s17, 3
      %p112 = por %p110, %p111
      %p113 = scmp.ne.s32.totalorder %s105, %s108
      %p114 = scmp.eq.s32.totalorder %s17, 0
      %p115 = por %p113, %p114
      %p116 = scmp.ne.s32.totalorder %s105, %s108
      %p117 = scmp.eq.s32.totalorder %s22, 3
      %p118 = por %p116, %p117
      %p119 = scmp.ne.s32.totalorder %s108, %s109
      %p120 = scmp.eq.s32.totalorder %s22, 0
      %p121 = por %p119, %p120
      %p122 = scmp.ne.s32.totalorder %s108, %s109
      %p123 = scmp.eq.s32.totalorder %s23, 3
      %p124 = por %p122, %p123
      %p126 = scmp.ne.s32.totalorder %s109, %s125
      %p127 = scmp.eq.s32.totalorder %s23, 0
      %p128 = por %p126, %p127
      %s130 = sadd.s32 %s129, 1
      %p133 = scmp.eq.s32.totalorder %s17, 3
      %p134 = scmp.ne.s32.totalorder %s129, %s131
      %p135 = scmp.eq.s32.totalorder %s17, 0
      %p136 = por %p134, %p135
      %p137 = scmp.ne.s32.totalorder %s129, %s131
      %p138 = scmp.eq.s32.totalorder %s22, 3
      %p139 = por %p137, %p138
      %p140 = scmp.ne.s32.totalorder %s131, %s132
      %p141 = scmp.eq.s32.totalorder %s22, 0
      %p142 = por %p140, %p141
      %p143 = scmp.ne.s32.totalorder %s131, %s132
      %p144 = scmp.eq.s32.totalorder %s23, 3
      %p145 = por %p143, %p144
      %p147 = scmp.ne.s32.totalorder %s132, %s146
      %p148 = scmp.eq.s32.totalorder %s23, 0
      %p149 = por %p147, %p148
      %s150 = ssub.s32 %s17, %s24
      %p151 = scmp.eq.s32.totalorder %s150, 0
      %s153 = sadd.s32 %s152, 1
      %s154 = scalar_select %p151, %s152, %s153
      %p157 = pneg %p151
      %p158 = scmp.eq.s32.totalorder %s17, 3
      %p159 = por %p157, %p158
      %p160 = scmp.ne.s32.totalorder %s152, %s155
      %p161 = scmp.eq.s32.totalorder %s17, 0
      %p162 = por %p160, %p161
      %p163 = scmp.ne.s32.totalorder %s152, %s155
      %p164 = scmp.eq.s32.totalorder %s22, 3
      %p165 = por %p163, %p164
      %p166 = scmp.ne.s32.totalorder %s155, %s156
      %p167 = scmp.eq.s32.totalorder %s22, 0
      %p168 = por %p166, %p167
      %p169 = scmp.ne.s32.totalorder %s155, %s156
      %p170 = scmp.eq.s32.totalorder %s23, 3
      %p171 = por %p169, %p170
      %p173 = scmp.ne.s32.totalorder %s156, %s172
      %p174 = scmp.eq.s32.totalorder %s23, 0
      %p175 = por %p173, %p174
      %p176 = scmp.le.s32.totalorder 1, %s17
      %p177 = scmp.lt.s32.totalorder %s17, 5
      %p178 = pnand %p176, %p177
      %p179 = pneg %p178
      // Predicated region
      $region9: #{tpu_custom_call.1} parent=5 // pred_check
        _
      $region10: #{tpu_custom_call.1} parent=5 // pred_check_branch
        %181 = sbr.rel (%p178) target = $region12
      $region11: #{tpu_custom_call.1} parent=5 // pred_region
        %s182 = ssub.s32 %s17, 1
        // Predicated region
        $region13: #{tpu_custom_call.1} parent=11 // pred_check
          %p183 = pneg %p142
        $region14: #{tpu_custom_call.1} parent=11 // pred_check_branch
          %185 = sbr.rel (%p183) target = $region16
        $region15: #{tpu_custom_call.1} parent=11 // pred_region
          _
        $region16: #{tpu_custom_call.1} parent=11 // pred_fallthru
          _
      $region12: #{tpu_custom_call.1} parent=5 // pred_fallthru
        _
      %p186 = scmp.lt.s32.totalorder %s17, 4
      // Predicated region
      $region17: #{tpu_custom_call.1} parent=5 // pred_check
        %p187 = pneg %p186
      $region18: #{tpu_custom_call.1} parent=5 // pred_check_branch
        %189 = sbr.rel (%p187) target = $region20
      $region19: #{tpu_custom_call.1} parent=5 // pred_region
        // Predicated region
        $region21: #{tpu_custom_call.1} parent=19 // pred_check
          %p190 = pneg %p37
        $region22: #{tpu_custom_call.1} parent=19 // pred_check_branch
          %192 = sbr.rel (%p190) target = $region24
        $region23: #{tpu_custom_call.1} parent=19 // pred_region
          %p193 = scmp.lt.s32.totalorder %s17, 3
          %s194 = scalar_select %p193, %s17, 3
          %s195 = smul.addr %s194, 2
          %s196 = smul.addr %s195, 8
          %s197 = scalar_lea.vmem %s0, %s196
        $region24: #{tpu_custom_call.1} parent=19 // pred_fallthru
          _
        // Predicated region
        $region25: #{tpu_custom_call.1} parent=19 // pred_check
          %p198 = pneg %p63
        $region26: #{tpu_custom_call.1} parent=19 // pred_check_branch
          %200 = sbr.rel (%p198) target = $region28
        $region27: #{tpu_custom_call.1} parent=19 // pred_region
          %s201 = sand.u32 %s53, 1
          %s202 = scalar_lea.sflag [#allocation5], %s201
          %s203 = sand.u32 %s53, 1
          %s204 = smul.addr %s203, 4
          %s205 = scalar_lea.vmem [#allocation4], %s204
          %207 = vsyncadd %s202, 0
          %s208 = smul.addr %s17, 4
          %s209 = scalar_lea.hbm %s1, %s208
          %s211 = sshll.u32 %s209, 4
          %s212 = int_to_ptr.hbm [resolvable:$true] %s211
          %s213 = sshll.u32 %s205, 4
          %s214 = int_to_ptr.vmem [resolvable:$true] %s213
          %216 = dma.hbm_to_vmem [thread:$0]  %s212, 64, %s214, %s202
        $region28: #{tpu_custom_call.1} parent=19 // pred_fallthru
          _
        // Predicated region
        $region29: #{tpu_custom_call.1} parent=19 // pred_check
          %p217 = pneg %p89
        $region30: #{tpu_custom_call.1} parent=19 // pred_check_branch
          %219 = sbr.rel (%p217) target = $region32
        $region31: #{tpu_custom_call.1} parent=19 // pred_region
          %p220 = scmp.lt.s32.totalorder %s17, 3
          %s221 = scalar_select %p220, %s17, 3
          %s222 = smul.addr %s221, 8
          %s223 = scalar_lea.vmem %s2, %s222
        $region32: #{tpu_custom_call.1} parent=19 // pred_fallthru
          _
        // Predicated region
        $region33: #{tpu_custom_call.1} parent=19 // pred_check
          %p224 = pneg %p115
        $region34: #{tpu_custom_call.1} parent=19 // pred_check_branch
          %226 = sbr.rel (%p224) target = $region36
        $region35: #{tpu_custom_call.1} parent=19 // pred_region
          %p227 = scmp.lt.s32.totalorder %s17, 3
          %s228 = scalar_select %p227, %s17, 3
          %s229 = smul.addr %s228, 8
          %s230 = scalar_lea.vmem %s3, %s229
        $region36: #{tpu_custom_call.1} parent=19 // pred_fallthru
          _
      $region20: #{tpu_custom_call.1} parent=5 // pred_fallthru
        _
      %p231 = scmp.le.s32.totalorder 1, %s17
      %p232 = scmp.lt.s32.totalorder %s17, 5
      %p233 = pnand %p231, %p232
      %p234 = pneg %p233
      // Predicated region
      $region37: #{tpu_custom_call.1} parent=5 // pred_check
        _
      $region38: #{tpu_custom_call.1} parent=5 // pred_check_branch
        %236 = sbr.rel (%p233) target = $region40
      $region39: #{tpu_custom_call.1} parent=5 // pred_region
        %s237 = ssub.s32 %s17, 1
        %s238 = sand.u32 %s56, 1
        %s239 = scalar_lea.sflag [#allocation5], %s238
        %s240 = sand.u32 %s56, 1
        %s241 = smul.addr %s240, 4
        %s242 = scalar_lea.vmem [#allocation4], %s241
        // Predicated region
        $region41: #{tpu_custom_call.1} parent=39 // pred_check
          %p243 = pneg %p69
        $region42: #{tpu_custom_call.1} parent=39 // pred_check_branch
          %245 = sbr.rel (%p243) target = $region44
        $region43: #{tpu_custom_call.1} parent=39 // pred_region
          %247 = dma.done %s239, 64
        $region44: #{tpu_custom_call.1} parent=39 // pred_fallthru
          _
        %p248 = scmp.lt.s32.totalorder %s22, 3
        %s249 = scalar_select %p248, %s22, 3
        %s250 = smul.addr %s249, 2
        %s251 = smul.addr %s250, 8
        %s252 = scalar_lea.vmem %s0, %s251
        %p253 = pneg %p43
        %p254 = pneg %p40
        %s255 = sand.u32 %s56, 1
        %s256 = scalar_lea.sflag [#allocation5], %s255
        %s257 = sand.u32 %s56, 1
        %s258 = smul.addr %s257, 4
        %s259 = scalar_lea.vmem [#allocation4], %s258
        %p260 = pneg %p69
        %p261 = pneg %p66
        %p262 = scmp.lt.s32.totalorder %s22, 3
        %s263 = scalar_select %p262, %s22, 3
        %s264 = smul.addr %s263, 8
        %s265 = scalar_lea.vmem %s2, %s264
        %p266 = pneg %p95
        %p267 = pneg %p92
        %p268 = scmp.lt.s32.totalorder %s22, 3
        %s269 = scalar_select %p268, %s22, 3
        %s270 = smul.addr %s269, 8
        %s271 = scalar_lea.vmem %s3, %s270
        %p272 = pneg %p121
        %p273 = pneg %p118
        %p274 = pneg %p142
        %p275 = pneg %p139
        %p276 = pneg %p168
        %p277 = pneg %p165
        %s278 = sand.u32 %s155, 1
        %s279 = scalar_lea.sflag [#allocation6], %s278
        %s280 = sand.u32 %s155, 1
        %s281 = smul.addr %s280, 16
        %s282 = scalar_lea.vmem [#allocation7], %s281
        %p283 = scmp.lt.s32.totalorder %s22, 3
        %s284 = scalar_select %p283, %s22, 3
        %s285 = smul.addr %s284, 2
        %s286 = smul.addr %s285, 8
        %s287 = scalar_lea.vmem %s0, %s286
        %p288 = scmp.lt.s32.totalorder %s22, 3
        %s289 = scalar_select %p288, %s22, 3
        %s290 = smul.addr %s289, 8
        %s291 = scalar_lea.vmem %s2, %s290
        %p292 = scmp.lt.s32.totalorder %s22, 3
        %s293 = scalar_select %p292, %s22, 3
        %s294 = smul.addr %s293, 8
        %s295 = scalar_lea.vmem %s3, %s294
        %297 = vst [vmem:[#allocation2] sm:$0xf] 0
        %298 = vst [vmem:[#allocation2 + $0xc] sm:$0xf] 0
        %v299 = vld [vmem:[%s287] sm:$0xff]
        %v300 = vld [vmem:[%s287 + $0x8] sm:$0xff]
        %v301 = vmax.f32 %v299, 0.0
        %v302 = vmax.f32 %v300, 0.0
        %v303 = vpack.c.bf16 %v302, %v301
        %304 = vst [vmem:[#allocation2 + $0x4] sm:$0xff] %v303
        %v305 = vld [vmem:[%s4] sm:$0x3]
        %v306 = vld [vmem:[#allocation2] sm:$0xff]
        %v307 = vld [vmem:[#allocation2 + $0x8] sm:$0xf]
        %309 = vst [vmem:[#allocation1] ss:$9 sm:$0xff] %v305
        %v310 = vld [vmem:[#allocation1] sm:$0xff]
        %v311 = vld [vmem:[#allocation1 + $0x9] sm:$0xff]
        %v312 = vpack.i.b16 %v310, %v310
        %v314 = vperm.slane %v312, 0
        %v315 = vpack.i.b16 %v311, %v311
        %v317 = vperm.slane %v315, 0
        %v318 = vunpack.c.l.bf16 %v306
        %v319 = vunpack.c.h.bf16 %v306
        %v320 = vunpack.c.l.bf16 %v307
        %v321 = vunpack.c.l.bf16 %v314
        %v322 = vunpack.c.l.bf16 %v317
        %325 = vrot.lane.b32.xlu0 %v321, 111
        %v326 = vpop.permute.xlu0 %325
        %327 = vrot.lane.b32.xlu0 %v322, 111
        %v328 = vpop.permute.xlu0 %327
        %vm329 = vcmask 908288
        %v330 = vsel %vm329, %v326, %v328
        %v334 = vmul.f32 %v318, %v326
        %v335 = vmul.f32 %v319, %v330
        %v336 = vmul.f32 %v320, %v328
        %v337 = vpack.c.bf16 %v335, %v334
        %v338 = vpack.c.bf16 %v336, %v336
        %341 = vrot.lane.b32.xlu0 %v337, 17
        %v342 = vpop.permute.xlu0 %341
        %343 = vrot.lane.b32.xlu0 %v338, 17
        %v344 = vpop.permute.xlu0 %343
        %v345 = vrot.slane %v342, 4
        %v346 = vrot.slane %v344, 4
        %vm347 = vcmask 1043456
        %v348 = vsel %vm347, %v345, %v346
        %vm349 = vcmask 138240
        %v350 = vsel %vm349, %v342, %v348
        %352 = vst [vmem:[#allocation3] sm:$0xff] %v350
        %v353 = vld [vmem:[#allocation2] sm:$0xff]
        %v354 = vld [vmem:[#allocation2 + $0x8] sm:$0xf]
        %357 = vrot.lane.b32.xlu0 %v353, 16
        %v358 = vpop.permute.xlu0 %357
        %359 = vrot.lane.b32.xlu0 %v354, 16
        %v360 = vpop.permute.xlu0 %359
        %v361 = vrot.slane %v358, 4
        %v362 = vrot.slane %v360, 4
        %v363 = vsel %vm347, %v361, %v362
        %vm364 = vcmask 130048
        %v365 = vsel %vm364, %v358, %v363
        %367 = vst [vmem:[#allocation3 + $0x8] sm:$0xff] %v365
        %v368 = vld [vmem:[#allocation2] sm:$0xff]
        %v369 = vld [vmem:[#allocation2 + $0x8] sm:$0xf]
        %370 = vst [vmem:[#allocation1] ss:$9 sm:$0xff] %v305
        %v371 = vld [vmem:[#allocation1] sm:$0xff]
        %v372 = vld [vmem:[#allocation1 + $0x9] sm:$0xff]
        %v373 = vshrl.u32 %v371, 16
        %v374 = vpack.i.b16 %v373, %v373
        %v376 = vperm.slane %v374, 0
        %v377 = vshrl.u32 %v372, 16
        %v378 = vpack.i.b16 %v377, %v377
        %v380 = vperm.slane %v378, 0
        %v381 = vunpack.c.l.bf16 %v368
        %v382 = vunpack.c.h.bf16 %v368
        %v383 = vunpack.c.l.bf16 %v369
        %v384 = vunpack.c.l.bf16 %v376
        %v385 = vunpack.c.l.bf16 %v380
        %388 = vrot.lane.b32.xlu0 %v384, 113
        %v389 = vpop.permute.xlu0 %388
        %390 = vrot.lane.b32.xlu0 %v385, 113
        %v391 = vpop.permute.xlu0 %390
        %vm392 = vcmask 924672
        %v393 = vsel %vm392, %v389, %v391
        %v397 = vmul.f32 %v381, %v389
        %v398 = vmul.f32 %v382, %v393
        %v399 = vmul.f32 %v383, %v391
        %v400 = vpack.c.bf16 %v398, %v397
        %v401 = vpack.c.bf16 %v399, %v399
        %404 = vrot.lane.b32.xlu0 %v400, 15
        %v405 = vpop.permute.xlu0 %404
        %406 = vrot.lane.b32.xlu0 %v401, 15
        %v407 = vpop.permute.xlu0 %406
        %v408 = vrot.slane %v405, 4
        %v409 = vrot.slane %v407, 4
        %v410 = vsel %vm347, %v408, %v409
        %vm411 = vcmask 121856
        %v412 = vsel %vm411, %v405, %v410
        %414 = vst [vmem:[#allocation3 + $0x10] sm:$0xff] %v412
        %v415 = vld [vmem:[#allocation2] sm:$0xff]
        %v416 = vld [vmem:[#allocation2 + $0x8] sm:$0xf]
        %v417 = vunpack.c.l.bf16 %v415
        %v418 = vunpack.c.h.bf16 %v415
        %v419 = vunpack.c.l.bf16 %v416
        %420 = vrot.lane.b32.xlu0 %v321, 127
        %v421 = vpop.permute.xlu0 %420
        %422 = vrot.lane.b32.xlu0 %v322, 127
        %v423 = vpop.permute.xlu0 %422
        %vm424 = vcmask 1039360
        %v425 = vsel %vm424, %v421, %v423
        %v429 = vmul.f32 %v417, %v421
        %v430 = vmul.f32 %v418, %v425
        %v431 = vmul.f32 %v419, %v423
        %v432 = vpack.c.bf16 %v430, %v429
        %v433 = vpack.c.bf16 %v431, %v431
        %436 = vrot.lane.b32.xlu0 %v432, 1
        %v437 = vpop.permute.xlu0 %436
        %438 = vrot.lane.b32.xlu0 %v433, 1
        %v439 = vpop.permute.xlu0 %438
        %v440 = vrot.slane %v437, 4
        %v441 = vrot.slane %v439, 4
        %v442 = vsel %vm347, %v440, %v441
        %vm443 = vcmask 7168
        %v444 = vsel %vm443, %v437, %v442
        %446 = vst [vmem:[#allocation3 + $0x18] sm:$0xff] %v444
        %v447 = vld [vmem:[#allocation2 + $0x4] sm:$0xff]
        %448 = vst [vmem:[#allocation3 + $0x20] sm:$0xff] %v447
        %v449 = vld [vmem:[#allocation2 + $0x4] sm:$0xff]
        %v450 = vld [vmem:[#allocation2 + $0xc] sm:$0xf]
        %v451 = vunpack.c.l.bf16 %v449
        %v452 = vunpack.c.h.bf16 %v449
        %v453 = vunpack.c.l.bf16 %v450
        %454 = vrot.lane.b32.xlu0 %v384, 1
        %v455 = vpop.permute.xlu0 %454
        %456 = vrot.lane.b32.xlu0 %v385, 1
        %v457 = vpop.permute.xlu0 %456
        %vm458 = vcmask 7168
        %v459 = vsel %vm458, %v455, %v457
        %v463 = vmul.f32 %v451, %v455
        %v464 = vmul.f32 %v452, %v459
        %v465 = vmul.f32 %v453, %v457
        %v466 = vpack.c.bf16 %v464, %v463
        %v467 = vpack.c.bf16 %v465, %v465
        %470 = vrot.lane.b32.xlu0 %v466, 127
        %v471 = vpop.permute.xlu0 %470
        %472 = vrot.lane.b32.xlu0 %v467, 127
        %v473 = vpop.permute.xlu0 %472
        %v474 = vrot.slane %v471, 4
        %v475 = vrot.slane %v473, 4
        %v476 = vsel %vm347, %v474, %v475
        %vm477 = vcmask 1039360
        %v478 = vsel %vm477, %v471, %v476
        %480 = vst [vmem:[#allocation3 + $0x28] sm:$0xff] %v478
        %v481 = vld [vmem:[#allocation2 + $0x4] sm:$0xff]
        %v482 = vld [vmem:[#allocation2 + $0xc] sm:$0xf]
        %v483 = vunpack.c.l.bf16 %v481
        %v484 = vunpack.c.h.bf16 %v481
        %v485 = vunpack.c.l.bf16 %v482
        %486 = vrot.lane.b32.xlu0 %v321, 15
        %v487 = vpop.permute.xlu0 %486
        %488 = vrot.lane.b32.xlu0 %v322, 15
        %v489 = vpop.permute.xlu0 %488
        %vm490 = vcmask 121856
        %v491 = vsel %vm490, %v487, %v489
        %v495 = vmul.f32 %v483, %v487
        %v496 = vmul.f32 %v484, %v491
        %v497 = vmul.f32 %v485, %v489
        %v498 = vpack.c.bf16 %v496, %v495
        %v499 = vpack.c.bf16 %v497, %v497
        %502 = vrot.lane.b32.xlu0 %v498, 113
        %v503 = vpop.permute.xlu0 %502
        %504 = vrot.lane.b32.xlu0 %v499, 113
        %v505 = vpop.permute.xlu0 %504
        %v506 = vrot.slane %v503, 4
        %v507 = vrot.slane %v505, 4
        %v508 = vsel %vm347, %v506, %v507
        %vm509 = vcmask 924672
        %v510 = vsel %vm509, %v503, %v508
        %512 = vst [vmem:[#allocation3 + $0x30] sm:$0xff] %v510
        %v513 = vld [vmem:[#allocation2 + $0x4] sm:$0xff]
        %v514 = vld [vmem:[#allocation2 + $0xc] sm:$0xf]
        %517 = vrot.lane.b32.xlu0 %v513, 112
        %v518 = vpop.permute.xlu0 %517
        %519 = vrot.lane.b32.xlu0 %v514, 112
        %v520 = vpop.permute.xlu0 %519
        %v521 = vrot.slane %v518, 4
        %v522 = vrot.slane %v520, 4
        %v523 = vsel %vm347, %v521, %v522
        %vm524 = vcmask 916480
        %v525 = vsel %vm524, %v518, %v523
        %527 = vst [vmem:[#allocation3 + $0x38] sm:$0xff] %v525
        %v528 = vld [vmem:[#allocation2 + $0x4] sm:$0xff]
        %v529 = vld [vmem:[#allocation2 + $0xc] sm:$0xf]
        %v530 = vunpack.c.l.bf16 %v528
        %v531 = vunpack.c.h.bf16 %v528
        %v532 = vunpack.c.l.bf16 %v529
        %533 = vrot.lane.b32.xlu0 %v384, 17
        %v534 = vpop.permute.xlu0 %533
        %535 = vrot.lane.b32.xlu0 %v385, 17
        %v536 = vpop.permute.xlu0 %535
        %vm537 = vcmask 138240
        %v538 = vsel %vm537, %v534, %v536
        %v542 = vmul.f32 %v530, %v534
        %v543 = vmul.f32 %v531, %v538
        %v544 = vmul.f32 %v532, %v536
        %v545 = vpack.c.bf16 %v543, %v542
        %v546 = vpack.c.bf16 %v544, %v544
        %549 = vrot.lane.b32.xlu0 %v545, 111
        %v550 = vpop.permute.xlu0 %549
        %551 = vrot.lane.b32.xlu0 %v546, 111
        %v552 = vpop.permute.xlu0 %551
        %v553 = vrot.slane %v550, 4
        %v554 = vrot.slane %v552, 4
        %v555 = vsel %vm347, %v553, %v554
        %vm556 = vcmask 908288
        %v557 = vsel %vm556, %v550, %v555
        %559 = vst [vmem:[#allocation3 + $0x40] sm:$0xff] %v557
        %v560 = vld [vmem:[%s242] sm:$0xf]
        %v561 = vld [vmem:[#allocation3] sm:$0xff]
        %v562 = vld [vmem:[#allocation3 + $0x8] sm:$0xff]
        %v563 = vld [vmem:[#allocation3 + $0x10] sm:$0xff]
        %v564 = vld [vmem:[#allocation3 + $0x18] sm:$0xff]
        %v565 = vld [vmem:[#allocation3 + $0x20] sm:$0xff]
        %v566 = vld [vmem:[#allocation3 + $0x28] sm:$0xff]
        %v567 = vld [vmem:[#allocation3 + $0x30] sm:$0xff]
        %v568 = vld [vmem:[#allocation3 + $0x38] sm:$0xff]
        %v569 = vld [vmem:[#allocation3 + $0x40] sm:$0xff]
        %v579 = vunpack.c.l.b16 %v561
        %v580 = vunpack.c.h.b16 %v561
        %v581 = vunpack.c.l.b16 %v562
        %v582 = vunpack.c.h.b16 %v562
        %v583 = vunpack.c.l.b16 %v563
        %v584 = vunpack.c.h.b16 %v563
        %v585 = vunpack.c.l.b16 %v564
        %v586 = vunpack.c.h.b16 %v564
        %v587 = vunpack.c.l.b16 %v565
        %v588 = vunpack.c.h.b16 %v565
        %v589 = vunpack.c.l.b16 %v566
        %v590 = vunpack.c.h.b16 %v566
        %v591 = vunpack.c.l.b16 %v567
        %v592 = vunpack.c.h.b16 %v567
        %v593 = vunpack.c.l.b16 %v568
        %v594 = vunpack.c.h.b16 %v568
        %v595 = vunpack.c.l.b16 %v569
        %v596 = vunpack.c.h.b16 %v569
        %v597 = vpack.c.b16 %v581, %v579
        %v598 = vpack.c.b16 %v582, %v580
        %v599 = vpack.c.b16 %v585, %v583
        %v600 = vpack.c.b16 %v586, %v584
        %v601 = vpack.c.b16 %v589, %v587
        %v602 = vpack.c.b16 %v590, %v588
        %v603 = vpack.c.b16 %v593, %v591
        %v604 = vpack.c.b16 %v594, %v592
        %v605 = vpack.c.b16 %v595, %v595
        %v606 = vpack.c.b16 %v596, %v596
        %vm615 = vcmask 588800
        %v617 = vsel %vm615, %v560, 0
        %vm619 = vcmask 1043456
        %v621 = vsel %vm619, %v605, 0
        %v624 = vsel %vm619, %v606, 0
        %626 = vmatpush.bf16.msra.mxu0 0
        %627 = vmatpush.bf16.msra.mxu0 0
        %628 = vmatpush.bf16.msra.mxu0 0
        %629 = vmatpush.bf16.msra.mxu0 %v621
        %630 = vmatpush.bf16.msra.mxu0 %v603
        %631 = vmatpush.bf16.msra.mxu0 %v601
        %632 = vmatpush.bf16.msra.mxu0 %v599
        %633 = vmatpush.bf16.msra.mxu0 %v597
        %634 = vmatmul.bf16.gmra.mxu0 %v617
        %v635 = vpop.f32.mrf.mxu0
        %v636 = vadd.f32 0.0, %v635
        %v637 = vpop.f32.mrf.mxu0
        %638 = vdwg.mxu0
        %639 = vmatpush.bf16.msra.mxu0 0
        %640 = vmatpush.bf16.msra.mxu0 0
        %641 = vmatpush.bf16.msra.mxu0 0
        %642 = vmatpush.bf16.msra.mxu0 %v624
        %643 = vmatpush.bf16.msra.mxu0 %v604
        %644 = vmatpush.bf16.msra.mxu0 %v602
        %645 = vmatpush.bf16.msra.mxu0 %v600
        %646 = vmatpush.bf16.msra.mxu0 %v598
        %647 = vmatmul.bf16.gmra.mxu0 %v617
        %v648 = vpop.f32.mrf.mxu0
        %v649 = vadd.f32 0.0, %v648
        %v650 = vpop.f32.mrf.mxu0
        %651 = vdwg.mxu0
        %652 = vst [vmem:[%s282] sm:$0xff] %v636
        %653 = vst [vmem:[%s282 + $0x8] sm:$0xff] %v649
        %v654 = vadd.f32 %v636, %v649
        %655 = vadd.xlane.f32.xlu0 %v654
        %v656 = vpop.xlane.xlu0 %655
        %v657 = vadd.f32 %v656, 0.0
        %v658 = vmul.f32 %v657, 0.00390625
        %v659 = vld [vmem:[%s282] sm:$0xff]
        %v660 = vld [vmem:[%s282 + $0x8] sm:$0xff]
        %v661 = vsub.f32 %v659, %v658
        %v662 = vsub.f32 %v660, %v658
        %v663 = vmul.f32 %v661, %v661
        %v664 = vmul.f32 %v662, %v662
        %v665 = vadd.f32 %v663, %v664
        %666 = vadd.xlane.f32.xlu0 %v665
        %v667 = vpop.xlane.xlu0 %666
        %v668 = vadd.f32 %v667, 0.0
        %v669 = vmul.f32 %v668, 0.00390625
        %v670 = vld [vmem:[%s291] sm:$0xff]
        %v671 = vadd.f32 %v669, 1e-05
        %v672 = vrsqrt.pop %v671
        %v673 = vmul.f32 %v672, %v671
        %v674 = vmul.f32 %v673, %v672
        %v675 = vmul.f32 0.5, %v674
        %v676 = vsub.f32 1.5, %v675
        %v677 = vmul.f32 %v672, %v676
        %vm678 = vweird.f32 %v671
        %vm679 = vweird.f32 %v672
        %vm680 = vmor %vm678, %vm679
        %v681 = vsel %vm680, %v672, %v677
        %v682 = vmul.f32 %v670, %v681
        %v683 = vld [vmem:[%s295] sm:$0xff]
        %v684 = vmul.f32 %v658, %v682
        %v685 = vsub.f32 %v683, %v684
        %687 = vset.pattern.permute.xlu0 0
        %688 = vperm.xlu0 %687, %v682
        %v689 = vpop.permute.xlu0 %688
        %v691 = vmul.f32 %v659, %v689
        %v692 = vmul.f32 %v660, %v689
        %694 = vset.pattern.permute.xlu0 0
        %695 = vperm.xlu0 %694, %v685
        %v696 = vpop.permute.xlu0 %695
        %v698 = vadd.f32 %v691, %v696
        %v699 = vadd.f32 %v692, %v696
        %v700 = vmax.f32 %v698, 0.0
        %v701 = vmax.f32 %v699, 0.0
        %702 = vst [vmem:[%s282] sm:$0xff] %v700
        %703 = vst [vmem:[%s282 + $0x8] sm:$0xff] %v701
        %s704 = sand.u32 %s155, 1
        %s705 = scalar_lea.sflag [#allocation6], %s704
        %s706 = sand.u32 %s155, 1
        %s707 = smul.addr %s706, 16
        %s708 = scalar_lea.vmem [#allocation7], %s707
        // Predicated region
        $region45: #{tpu_custom_call.1} parent=39 // pred_check
          %p709 = pneg %p165
        $region46: #{tpu_custom_call.1} parent=39 // pred_check_branch
          %711 = sbr.rel (%p709) target = $region48
        $region47: #{tpu_custom_call.1} parent=39 // pred_region
          %713 = vsyncadd %s705, 0
          %s714 = smul.addr %s22, 2
          %s715 = smul.addr %s714, 8
          %s716 = scalar_lea.hbm %s5, %s715
          %s718 = sshll.u32 %s708, 4
          %s719 = int_to_ptr.vmem [resolvable:$true] %s718
          %s720 = sshll.u32 %s716, 4
          %s721 = int_to_ptr.hbm [resolvable:$true] %s720
          %723 = dma.vmem_to_hbm [thread:$0]  %s719, 256, %s721, %s705
        $region48: #{tpu_custom_call.1} parent=39 // pred_fallthru
          _
      $region40: #{tpu_custom_call.1} parent=5 // pred_fallthru
        _
      %p724 = scmp.le.s32.totalorder 2, %s17
      // Predicated region
      $region49: #{tpu_custom_call.1} parent=5 // pred_check
        %p725 = pneg %p724
      $region50: #{tpu_custom_call.1} parent=5 // pred_check_branch
        %727 = sbr.rel (%p725) target = $region52
      $region51: #{tpu_custom_call.1} parent=5 // pred_region
        %s728 = ssub.s32 %s17, 2
        // Predicated region
        $region53: #{tpu_custom_call.1} parent=51 // pred_check
          %p729 = pneg %p171
        $region54: #{tpu_custom_call.1} parent=51 // pred_check_branch
          %731 = sbr.rel (%p729) target = $region56
        $region55: #{tpu_custom_call.1} parent=51 // pred_region
          %s732 = sand.u32 %s156, 1
          %s733 = scalar_lea.sflag [#allocation6], %s732
          %s734 = sand.u32 %s156, 1
          %s735 = smul.addr %s734, 16
          %s736 = scalar_lea.vmem [#allocation7], %s735
          %738 = dma.done %s733, 256
        $region56: #{tpu_custom_call.1} parent=51 // pred_fallthru
          _
      $region52: #{tpu_custom_call.1} parent=5 // pred_fallthru
        _
    $region6: #{tpu_custom_call.1} parent=1 // loop_footer
      %s21 = sadd.s32 1, %s17
    $region7: #{tpu_custom_call.1} parent=1 // loop_footer_branch
      %16 = sbr.rel target = $region3
    $region8: #{tpu_custom_call.1} parent=1 // loop_exit
      _
    %739 = vsyncpa [#allocation5], 1
    %s740 = scalar_lea.sflag [#allocation5], 1
    %741 = vsyncpa %s740, 1
    %742 = vsyncpa [#allocation6], 1
    %s743 = scalar_lea.sflag [#allocation6], 1
    %744 = vsyncpa %s743, 1

</llo_original>
